<compile_context>
chip_gen: v5e
topology: v5e:2x2
jax: 0.10.0
libtpu: 0.0.40
codegen_flags: <defaults>
</compile_context>

<pallas_src>
import math
import functools

import jax
import jax.numpy as jnp
from jax.experimental import pallas as pl
from jax.experimental.pallas import tpu as pltpu


def _group_gru_kernel(x_ref, h_ref, wx_ref, wh_ref, out_ref, *, hidden_size):
    """One grid step: a block of Gb GRU groups x Bt batch rows.

    x_ref : (Gb, Bt, Din)    h_ref : (Gb, Bt, H)
    wx_ref: (Gb, Din, 3H)    wh_ref: (Gb, H, 3H)
    out_ref: (Gb, Bt, H)
    """
    H = hidden_size
    x = x_ref[...]
    h = h_ref[...]

    # Group-batched matmuls on the MXU, f32 accumulation.  The einsum specs
    # map 1:1 onto dot_general with `g` as a batch dim, so the result is
    # naturally group-major and no in-kernel transpose is generated.
    gate_x = jnp.einsum('gbd,gde->gbe', x, wx_ref[...],
                        preferred_element_type=jnp.float32)
    gate_h = jnp.einsum('gbh,ghe->gbe', h, wh_ref[...],
                        preferred_element_type=jnp.float32)

    i_r = gate_x[..., 0 * H:1 * H]
    i_i = gate_x[..., 1 * H:2 * H]
    i_n = gate_x[..., 2 * H:3 * H]
    h_r = gate_h[..., 0 * H:1 * H]
    h_i = gate_h[..., 1 * H:2 * H]
    h_n = gate_h[..., 2 * H:3 * H]

    # sigmoid/tanh route to the EUP slot (hidden under MXU/DMA); keep in f32.
    resetgate = jax.nn.sigmoid(i_r + h_r)
    inputgate = jax.nn.sigmoid(i_i + h_i)
    newgate = jnp.tanh(i_n + resetgate * h_n)

    h_f32 = h.astype(jnp.float32)
    hy = newgate + inputgate * (h_f32 - newgate)
    out_ref[...] = hy.astype(out_ref.dtype)


def _largest_divisor(n, cap, multiple_of=1):
    """Largest d dividing n with d <= cap and d % multiple_of == 0; else n."""
    if n <= cap:
        return n
    best = None
    d = multiple_of
    while d <= cap:
        if n % d == 0:
            best = d
        d += multiple_of
    return best if best is not None else n


def _choose_blocks(G, B, din, H, itemsize,
                   group_block=None, batch_block=None,
                   vmem_budget_bytes=12 * 1024 * 1024):
    # Batch tile: keep full batch unless large; partial batch tiles must be a
    # multiple of 8 (sublane) to satisfy the (8, 128) block constraint.
    if batch_block is None:
        batch_block = B if B <= 512 else _largest_divisor(B, 512, multiple_of=8)
    bt = batch_block
    assert B % bt == 0 and (bt == B or bt % 8 == 0), (
        f"batch_block={bt} must divide batch={B} and be a multiple of 8 "
        f"when smaller than the full batch")

    if group_block is None:
        # Per-group footprint of one grid step: activations (x, h, out) use
        # bt rows, weights use full (din, H); x2 for double buffering, plus
        # f32 gate temporaries.  Budgeted well inside the scoped VMEM limit
        # on all of v5e / v6e / v7x (v7x: 64 MiB physical).
        per_group = (2 * itemsize * (bt * (din + 2 * H) + 3 * H * (din + H))
                     + 4 * 2 * bt * 3 * H)
        cap = max(1, vmem_budget_bytes // per_group)
        group_block = _largest_divisor(G, cap, multiple_of=1)
    gb = group_block
    assert G % gb == 0, f"group_block={gb} must divide num_grus={G}"
    return gb, bt


def group_gru_cell_group_major(x_g, h_g, w_x2h, w_h2h, *,
                               group_block=None, batch_block=None):
    """Group-major GroupGRUCell forward (no layout transposes).

    x_g   : (num_grus, batch, input_size)
    h_g   : (num_grus, batch, hidden_size)
    w_x2h : (num_grus, input_size, 3*hidden_size)
    w_h2h : (num_grus, hidden_size, 3*hidden_size)
    returns (num_grus, batch, hidden_size)
    """
    G, B, din = x_g.shape
    H = h_g.shape[-1]
    assert h_g.shape == (G, B, H)
    assert w_x2h.shape == (G, din, 3 * H)
    assert w_h2h.shape == (G, H, 3 * H)

    gb, bt = _choose_blocks(G, B, din, H, x_g.dtype.itemsize,
                            group_block=group_block, batch_block=batch_block)
    grid = (G // gb, B // bt)

    kernel = functools.partial(_group_gru_kernel, hidden_size=H)

    itemsize = x_g.dtype.itemsize
    # Advisory cost hint so XLA schedules the custom call well inside jits.
    cost = pl.CostEstimate(
        flops=2 * G * B * 3 * H * (din + H) + 10 * G * B * H,
        transcendentals=3 * G * B * H,
        bytes_accessed=itemsize * (G * B * (din + 2 * H)
                                   + G * 3 * H * (din + H)),
    )

    return pl.pallas_call(
        kernel,
        out_shape=jax.ShapeDtypeStruct((G, B, H), h_g.dtype),
        grid_spec=pltpu.PrefetchScalarGridSpec(
            num_scalar_prefetch=0,
            grid=grid,
            in_specs=[
                pl.BlockSpec((gb, bt, din), lambda g, b: (g, b, 0)),
                pl.BlockSpec((gb, bt, H), lambda g, b: (g, b, 0)),
                # Weight index maps ignore the (inner) batch axis: each group
                # block's weights stay resident in VMEM across batch tiles.
                pl.BlockSpec((gb, din, 3 * H), lambda g, b: (g, 0, 0)),
                pl.BlockSpec((gb, H, 3 * H), lambda g, b: (g, 0, 0)),
            ],
            out_specs=pl.BlockSpec((gb, bt, H), lambda g, b: (g, b, 0)),
        ),
        compiler_params=pltpu.CompilerParams(
            # Group axis parallel (megacore-shardable on v7x); batch axis is
            # the inner, weight-resident axis.
            dimension_semantics=("parallel", "arbitrary"),
            vmem_limit_bytes=32 * 1024 * 1024,
        ),
        cost_estimate=cost,
    )(x_g, h_g, w_x2h, w_h2h)


def group_gru_cell(x, hidden, w_x2h, w_h2h, **block_kw):
    """PyTorch-convention wrapper: x/hidden are (batch, num_grus, feat).

    Prefer `group_gru_cell_group_major` end-to-end to avoid the boundary
    transposes (they are an extra HBM round trip at large batch*num_grus).
    """
    x_g = jnp.transpose(x, (1, 0, 2))        # (G, B, Din)
    h_g = jnp.transpose(hidden, (1, 0, 2))   # (G, B, H)
    out_g = group_gru_cell_group_major(x_g, h_g, w_x2h, w_h2h, **block_kw)
    return jnp.transpose(out_g, (1, 0, 2))   # (B, G, H)


def group_gru_cell_ref(x, hidden, w_x2h, w_h2h):
    """Pure-JAX reference mirroring the PyTorch module."""
    gate_x = jnp.einsum('bgd,gde->bge', x, w_x2h)
    gate_h = jnp.einsum('bgh,ghe->bge', hidden, w_h2h)
    H = hidden.shape[-1]
    i_r, i_i, i_n = gate_x[..., :H], gate_x[..., H:2 * H], gate_x[..., 2 * H:]
    h_r, h_i, h_n = gate_h[..., :H], gate_h[..., H:2 * H], gate_h[..., 2 * H:]
    resetgate = jax.nn.sigmoid(i_r + h_r)
    inputgate = jax.nn.sigmoid(i_i + h_i)
    newgate = jnp.tanh(i_n + resetgate * h_n)
    return newgate + inputgate * (hidden - newgate)


if __name__ == "__main__":
    def _check(batch, num_grus, input_size, hidden_size, **block_kw):
        key = jax.random.PRNGKey(0)
        kx, kh, kwx, kwh = jax.random.split(key, 4)
        x = jax.random.normal(kx, (batch, num_grus, input_size),
                              dtype=jnp.float32)
        hidden = jax.random.normal(kh, (batch, num_grus, hidden_size),
                                   dtype=jnp.float32)
        # Deterministic parameter init. NOTE: the PyTorch module's
        # reset_parameters() sets every weight to ones; scaled randoms keep
        # the gates in a numerically interesting regime while deterministic.
        std = 1.0 / math.sqrt(hidden_size)
        w_x2h = std * jax.random.normal(
            kwx, (num_grus, input_size, 3 * hidden_size), dtype=jnp.float32)
        w_h2h = std * jax.random.normal(
            kwh, (num_grus, hidden_size, 3 * hidden_size), dtype=jnp.float32)

        out = group_gru_cell(x, hidden, w_x2h, w_h2h, **block_kw)
        out = jax.block_until_ready(out)
        ref = group_gru_cell_ref(x, hidden, w_x2h, w_h2h)
        assert out.shape == (batch, num_grus, hidden_size)
        err = jnp.max(jnp.abs(out - ref))
        assert jnp.allclose(out, ref, atol=1e-5, rtol=1e-5), \
            f"mismatch vs reference (max abs err {err})"

    # Small shape matching the module's forward contract (single grid step).
    _check(batch=2, num_grus=4, input_size=16, hidden_size=32)
    # Exercise the tiled path: 2x2 grid, batch tile of 8 (multiple of 8),
    # weights resident across batch tiles.
    _check(batch=16, num_grus=8, input_size=16, hidden_size=32,
           group_block=4, batch_block=8)

    print("KERNEL_OK")
</pallas_src>

<mosaic_0001>
module attributes {stable_mosaic.version = 11 : i64} {
  func.func @_group_gru_kernel(%arg0: i32, %arg1: i32, %arg2: memref<4x2x16xf32, #tpu.memory_space<vmem>>, %arg3: memref<4x2x32xf32, #tpu.memory_space<vmem>>, %arg4: memref<4x16x96xf32, #tpu.memory_space<vmem>>, %arg5: memref<4x32x96xf32, #tpu.memory_space<vmem>>, %arg6: memref<4x2x32xf32, #tpu.memory_space<vmem>>) attributes {dimension_semantics = [#tpu.dimension_semantics<parallel>, #tpu.dimension_semantics<arbitrary>], iteration_bounds = array<i64: 1, 1>, scalar_prefetch = 0 : i64, scratch_operands = 0 : i64, tpu.core_type = #tpu.core_type<tc>, window_params = [{transform_indices = @transform_0, window_bounds = array<i64: 4, 2, 16>}, {transform_indices = @transform_1, window_bounds = array<i64: 4, 2, 32>}, {transform_indices = @transform_2, window_bounds = array<i64: 4, 16, 96>}, {transform_indices = @transform_3, window_bounds = array<i64: 4, 32, 96>}, {transform_indices = @transform_4, window_bounds = array<i64: 4, 2, 32>}]} {
    %c0 = arith.constant 0 : index
    %c0_0 = arith.constant 0 : index
    %c0_1 = arith.constant 0 : index
    %0 = vector.load %arg2[%c0, %c0_0, %c0_1] : memref<4x2x16xf32, #tpu.memory_space<vmem>>, vector<4x2x16xf32>
    %c0_2 = arith.constant 0 : index
    %c0_3 = arith.constant 0 : index
    %c0_4 = arith.constant 0 : index
    %1 = vector.load %arg3[%c0_2, %c0_3, %c0_4] : memref<4x2x32xf32, #tpu.memory_space<vmem>>, vector<4x2x32xf32>
    %c0_5 = arith.constant 0 : index
    %c0_6 = arith.constant 0 : index
    %c0_7 = arith.constant 0 : index
    %2 = vector.load %arg4[%c0_5, %c0_6, %c0_7] : memref<4x16x96xf32, #tpu.memory_space<vmem>>, vector<4x16x96xf32>
    "tpu.trace_start"() <{level = 10 : i32, message = "gbd,gde->gbe"}> : () -> ()
    %cst = arith.constant dense<0.000000e+00> : vector<4x2x96xf32>
    %3 = tpu.matmul %0, %2, %cst {dimension_numbers = #tpu.dot_dimension_numbers<[2], [1], [1], [2], [0, 0, 0, 1, 1, 2], [0], [0]>} : vector<4x2x16xf32>, vector<4x16x96xf32>, vector<4x2x96xf32> -> vector<4x2x96xf32>
    "tpu.trace_stop"() : () -> ()
    %c0_8 = arith.constant 0 : index
    %c0_9 = arith.constant 0 : index
    %c0_10 = arith.constant 0 : index
    %4 = vector.load %arg5[%c0_8, %c0_9, %c0_10] : memref<4x32x96xf32, #tpu.memory_space<vmem>>, vector<4x32x96xf32>
    "tpu.trace_start"() <{level = 10 : i32, message = "gbh,ghe->gbe"}> : () -> ()
    %cst_11 = arith.constant dense<0.000000e+00> : vector<4x2x96xf32>
    %5 = tpu.matmul %1, %4, %cst_11 {dimension_numbers = #tpu.dot_dimension_numbers<[2], [1], [1], [2], [0, 0, 0, 1, 1, 2], [0], [0]>} : vector<4x2x32xf32>, vector<4x32x96xf32>, vector<4x2x96xf32> -> vector<4x2x96xf32>
    "tpu.trace_stop"() : () -> ()
    %6 = vector.extract_strided_slice %3 {offsets = [0, 0, 0], sizes = [4, 2, 32], strides = [1, 1, 1]} : vector<4x2x96xf32> to vector<4x2x32xf32>
    %7 = vector.extract_strided_slice %3 {offsets = [0, 0, 32], sizes = [4, 2, 32], strides = [1, 1, 1]} : vector<4x2x96xf32> to vector<4x2x32xf32>
    %8 = vector.extract_strided_slice %3 {offsets = [0, 0, 64], sizes = [4, 2, 32], strides = [1, 1, 1]} : vector<4x2x96xf32> to vector<4x2x32xf32>
    %9 = vector.extract_strided_slice %5 {offsets = [0, 0, 0], sizes = [4, 2, 32], strides = [1, 1, 1]} : vector<4x2x96xf32> to vector<4x2x32xf32>
    %10 = vector.extract_strided_slice %5 {offsets = [0, 0, 32], sizes = [4, 2, 32], strides = [1, 1, 1]} : vector<4x2x96xf32> to vector<4x2x32xf32>
    %11 = vector.extract_strided_slice %5 {offsets = [0, 0, 64], sizes = [4, 2, 32], strides = [1, 1, 1]} : vector<4x2x96xf32> to vector<4x2x32xf32>
    %12 = arith.addf %6, %9 : vector<4x2x32xf32>
    %13 = arith.negf %12 : vector<4x2x32xf32>
    %14 = math.exp %13 : vector<4x2x32xf32>
    %cst_12 = arith.constant 1.000000e+00 : f32
    %15 = vector.broadcast %cst_12 : f32 to vector<4x2x32xf32>
    %16 = arith.addf %15, %14 : vector<4x2x32xf32>
    %17 = arith.divf %15, %16 : vector<4x2x32xf32>
    %18 = arith.addf %7, %10 : vector<4x2x32xf32>
    %19 = arith.negf %18 : vector<4x2x32xf32>
    %20 = math.exp %19 : vector<4x2x32xf32>
    %cst_13 = arith.constant 1.000000e+00 : f32
    %21 = vector.broadcast %cst_13 : f32 to vector<4x2x32xf32>
    %22 = arith.addf %21, %20 : vector<4x2x32xf32>
    %23 = arith.divf %21, %22 : vector<4x2x32xf32>
    %24 = arith.mulf %17, %11 : vector<4x2x32xf32>
    %25 = arith.addf %8, %24 : vector<4x2x32xf32>
    %26 = math.tanh %25 : vector<4x2x32xf32>
    %27 = arith.subf %1, %26 : vector<4x2x32xf32>
    %28 = arith.mulf %23, %27 : vector<4x2x32xf32>
    %29 = arith.addf %26, %28 : vector<4x2x32xf32>
    %c0_14 = arith.constant 0 : index
    %c0_15 = arith.constant 0 : index
    %c0_16 = arith.constant 0 : index
    %30 = vector.load %arg6[%c0_14, %c0_15, %c0_16] : memref<4x2x32xf32, #tpu.memory_space<vmem>>, vector<4x2x32xf32>
    tpu.vector_store %arg6[%c0_14, %c0_15, %c0_16], %29 {strides = array<i32>} : memref<4x2x32xf32, #tpu.memory_space<vmem>>, vector<4x2x32xf32>,
    return
  }
  func.func @transform_0(%arg0: i32, %arg1: i32) -> (i32, i32, i32) {
    %c0_i32 = arith.constant 0 : i32
    %c0_i32_0 = arith.constant 0 : i32
    return %arg0, %arg1, %c0_i32 : i32, i32, i32
  }
  func.func @transform_1(%arg0: i32, %arg1: i32) -> (i32, i32, i32) {
    %c0_i32 = arith.constant 0 : i32
    %c0_i32_0 = arith.constant 0 : i32
    return %arg0, %arg1, %c0_i32 : i32, i32, i32
  }
  func.func @transform_2(%arg0: i32, %arg1: i32) -> (i32, i32, i32) {
    %c0_i32 = arith.constant 0 : i32
    %c0_i32_0 = arith.constant 0 : i32
    %c0_i32_1 = arith.constant 0 : i32
    return %arg0, %c0_i32, %c0_i32_0 : i32, i32, i32
  }
  func.func @transform_3(%arg0: i32, %arg1: i32) -> (i32, i32, i32) {
    %c0_i32 = arith.constant 0 : i32
    %c0_i32_0 = arith.constant 0 : i32
    %c0_i32_1 = arith.constant 0 : i32
    return %arg0, %c0_i32, %c0_i32_0 : i32, i32, i32
  }
  func.func @transform_4(%arg0: i32, %arg1: i32) -> (i32, i32, i32) {
    %c0_i32 = arith.constant 0 : i32
    %c0_i32_0 = arith.constant 0 : i32
    return %arg0, %arg1, %c0_i32 : i32, i32, i32
  }
}

</mosaic_0001>

<llo_original>
// kernel: tpu_custom_call.1
$region0: #{tpu_custom_call.1}
  #allocation0 [shape = 'u32[]', space=smem, size = 0x4, offset = 0x4, fixed_abs, tag = 'smem constant byte address 0x4 - core index']
  #allocation1 [shape = 'u32[72,128]{1,0:T(1,128)}', space=vmem, size = 0x9000, scoped, tag = 'internal scratch']
  %s0 = inlined_call_operand.hbm [shape: f32[4,2,16], index: 0, kind: input, shape index: {}]
  %s1 = inlined_call_operand.hbm [shape: f32[4,2,32], index: 1, kind: input, shape index: {}]
  %s2 = inlined_call_operand.hbm [shape: f32[4,16,96], index: 2, kind: input, shape index: {}]
  %s3 = inlined_call_operand.hbm [shape: f32[4,32,96], index: 3, kind: input, shape index: {}]
  %s4 = inlined_call_operand.hbm [shape: f32[4,2,32], index: 4, kind: output, shape index: {}]
  %s5 = sld [smem:[#allocation0]]
  $region42: #{tpu_custom_call.1} parent=0
    _
  %s7 = ssub.s32 1, %s5
  %s8 = scalar_select 0, %s7, %s5
  $region1: #{tpu_custom_call.1} parent=0
    #allocation2 [shape = 'u8[4096]{0}', space=vmem, size = 0x1000, scoped, tag = 'input window, operand 0, single buffered']
    #allocation3 [shape = 's32[1]{0}', space=sflag, size = 0x4, scoped, tag = 'scoped memory for tpu_custom_call.1']
    #allocation4 [shape = 's32[1]{0}', space=sflag, size = 0x4, scoped, tag = 'scoped memory for tpu_custom_call.1']
    #allocation5 [shape = 'u8[4096]{0}', space=vmem, size = 0x1000, scoped, tag = 'input window, operand 1, single buffered']
    #allocation6 [shape = 's32[1]{0}', space=sflag, size = 0x4, scoped, tag = 'scoped memory for tpu_custom_call.1']
    #allocation7 [shape = 'u8[32768]{0}', space=vmem, size = 0x8000, scoped, tag = 'input window, operand 2, single buffered']
    #allocation8 [shape = 'u8[65536]{0}', space=vmem, size = 0x10000, scoped, tag = 'input window, operand 3, single buffered']
    #allocation9 [shape = 's32[1]{0}', space=sflag, size = 0x4, scoped, tag = 'scoped memory for tpu_custom_call.1']
    #allocation10 [shape = 'u8[4096]{0}', space=vmem, size = 0x1000, scoped, tag = 'output window, operand 0, single buffered']
    %9 = vsyncpa [#allocation3], 0
    %10 = vsyncpa [#allocation6], 0
    %11 = vsyncpa [#allocation9], 0
    %12 = vsyncpa [#allocation4], 0
    // Predicated region
    $region2: #{tpu_custom_call.1} parent=1 // pred_check
      _
    $region3: #{tpu_custom_call.1} parent=1 // pred_check_branch
      %14 = sbr.rel (0) target = $region5
    $region4: #{tpu_custom_call.1} parent=1 // pred_region
      %16 = vsyncadd [#allocation3], 0
      %s17 = sshll.u32 %s0, 4
      %s18 = int_to_ptr.hbm [resolvable:$true] %s17
      %s19 = sshll.u32 [#allocation2], 4
      %s20 = int_to_ptr.vmem [resolvable:$true] %s19
      %25 = dma.hbm_to_vmem [thread:$0]  %s18, 128, %s20, [#allocation3], 32, 32, 2
    $region5: #{tpu_custom_call.1} parent=1 // pred_fallthru
      _
    // Predicated region
    $region6: #{tpu_custom_call.1} parent=1 // pred_check
      _
    $region7: #{tpu_custom_call.1} parent=1 // pred_check_branch
      %27 = sbr.rel (0) target = $region9
    $region8: #{tpu_custom_call.1} parent=1 // pred_region
      %29 = vsyncadd [#allocation6], 0
      %s30 = sshll.u32 %s1, 4
      %s31 = int_to_ptr.hbm [resolvable:$true] %s30
      %s32 = sshll.u32 [#allocation5], 4
      %s33 = int_to_ptr.vmem [resolvable:$true] %s32
      %38 = dma.hbm_to_vmem [thread:$0]  %s31, 128, %s33, [#allocation6], 32, 32, 2
    $region9: #{tpu_custom_call.1} parent=1 // pred_fallthru
      _
    // Predicated region
    $region10: #{tpu_custom_call.1} parent=1 // pred_check
      _
    $region11: #{tpu_custom_call.1} parent=1 // pred_check_branch
      %40 = sbr.rel (0) target = $region13
    $region12: #{tpu_custom_call.1} parent=1 // pred_region
      %42 = vsyncadd [#allocation6], 0
      %s43 = sshll.u32 %s2, 4
      %s44 = int_to_ptr.hbm [resolvable:$true] %s43
      %s45 = sshll.u32 [#allocation7], 4
      %s46 = int_to_ptr.vmem [resolvable:$true] %s45
      %51 = dma.hbm_to_vmem [thread:$0]  %s44, 1024, %s46, [#allocation6], 128, 128, 8
    $region13: #{tpu_custom_call.1} parent=1 // pred_fallthru
      _
    // Predicated region
    $region14: #{tpu_custom_call.1} parent=1 // pred_check
      _
    $region15: #{tpu_custom_call.1} parent=1 // pred_check_branch
      %53 = sbr.rel (0) target = $region17
    $region16: #{tpu_custom_call.1} parent=1 // pred_region
      %55 = vsyncadd [#allocation9], 0
      %s56 = sshll.u32 %s3, 4
      %s57 = int_to_ptr.hbm [resolvable:$true] %s56
      %s58 = sshll.u32 [#allocation8], 4
      %s59 = int_to_ptr.vmem [resolvable:$true] %s58
      %64 = dma.hbm_to_vmem [thread:$0]  %s57, 2048, %s59, [#allocation9], 128, 128, 8
    $region17: #{tpu_custom_call.1} parent=1 // pred_fallthru
      _
    // Predicated region
    $region18: #{tpu_custom_call.1} parent=1 // pred_check
      _
    $region19: #{tpu_custom_call.1} parent=1 // pred_check_branch
      %66 = sbr.rel (0) target = $region21
    $region20: #{tpu_custom_call.1} parent=1 // pred_region
      %68 = dma.done [#allocation3], 128
    $region21: #{tpu_custom_call.1} parent=1 // pred_fallthru
      _
    // Predicated region
    $region22: #{tpu_custom_call.1} parent=1 // pred_check
      _
    $region23: #{tpu_custom_call.1} parent=1 // pred_check_branch
      %70 = sbr.rel (0) target = $region25
    $region24: #{tpu_custom_call.1} parent=1 // pred_region
      %72 = dma.done [#allocation6], 128
    $region25: #{tpu_custom_call.1} parent=1 // pred_fallthru
      _
    // Predicated region
    $region26: #{tpu_custom_call.1} parent=1 // pred_check
      _
    $region27: #{tpu_custom_call.1} parent=1 // pred_check_branch
      %74 = sbr.rel (0) target = $region29
    $region28: #{tpu_custom_call.1} parent=1 // pred_region
      %76 = dma.done [#allocation6], 1024
    $region29: #{tpu_custom_call.1} parent=1 // pred_fallthru
      _
    // Predicated region
    $region30: #{tpu_custom_call.1} parent=1 // pred_check
      _
    $region31: #{tpu_custom_call.1} parent=1 // pred_check_branch
      %78 = sbr.rel (0) target = $region33
    $region32: #{tpu_custom_call.1} parent=1 // pred_region
      %80 = dma.done [#allocation9], 2048
    $region33: #{tpu_custom_call.1} parent=1 // pred_fallthru
      _
    %v81 = vld [vmem:[#allocation2] sm:$0x3]
    %v82 = vld [vmem:[#allocation2 + $0x2] sm:$0x3]
    %v83 = vld [vmem:[#allocation2 + $0x4] sm:$0x3]
    %v84 = vld [vmem:[#allocation2 + $0x6] sm:$0x3]
    %v85 = vld [vmem:[#allocation5] sm:$0x3]
    %v86 = vld [vmem:[#allocation5 + $0x2] sm:$0x3]
    %v87 = vld [vmem:[#allocation5 + $0x4] sm:$0x3]
    %v88 = vld [vmem:[#allocation5 + $0x6] sm:$0x3]
    %v89 = vld [vmem:[#allocation7] sm:$0xff]
    %v90 = vld [vmem:[#allocation7 + $0x8] sm:$0xff]
    %v91 = vld [vmem:[#allocation7 + $0x10] sm:$0xff]
    %v92 = vld [vmem:[#allocation7 + $0x18] sm:$0xff]
    %v93 = vld [vmem:[#allocation7 + $0x20] sm:$0xff]
    %v94 = vld [vmem:[#allocation7 + $0x28] sm:$0xff]
    %v95 = vld [vmem:[#allocation7 + $0x30] sm:$0xff]
    %v96 = vld [vmem:[#allocation7 + $0x38] sm:$0xff]
    %vm97 = vcmask 130048
    %v99 = vsel %vm97, %v81, 0
    %101 = vmatpush.msra.mxu0 0.0
    %102 = vmatpush.msra.mxu0 0.0
    %103 = vmatpush.msra.mxu0 0.0
    %104 = vmatpush.msra.mxu0 0.0
    %105 = vmatpush.msra.mxu0 0.0
    %106 = vmatpush.msra.mxu0 0.0
    %107 = vmatpush.msra.mxu0 0.0
    %108 = vmatpush.msra.mxu0 0.0
    %109 = vmatpush.msra.mxu0 0.0
    %110 = vmatpush.msra.mxu0 0.0
    %111 = vmatpush.msra.mxu0 0.0
    %112 = vmatpush.msra.mxu0 0.0
    %113 = vmatpush.msra.mxu0 0.0
    %114 = vmatpush.msra.mxu0 0.0
    %115 = vmatpush.msra.mxu0 %v90
    %116 = vmatpush.msra.mxu0 %v89
    %117 = vmatmul.f32.gmra.mxu0 %v99
    %v118 = vpop.f32.mrf.mxu0
    %v119 = vadd.f32 0.0, %v118
    %120 = vdwg.mxu0
    %v122 = vsel %vm97, %v82, 0
    %124 = vmatpush.msra.mxu0 0.0
    %125 = vmatpush.msra.mxu0 0.0
    %126 = vmatpush.msra.mxu0 0.0
    %127 = vmatpush.msra.mxu0 0.0
    %128 = vmatpush.msra.mxu0 0.0
    %129 = vmatpush.msra.mxu0 0.0
    %130 = vmatpush.msra.mxu0 0.0
    %131 = vmatpush.msra.mxu0 0.0
    %132 = vmatpush.msra.mxu0 0.0
    %133 = vmatpush.msra.mxu0 0.0
    %134 = vmatpush.msra.mxu0 0.0
    %135 = vmatpush.msra.mxu0 0.0
    %136 = vmatpush.msra.mxu0 0.0
    %137 = vmatpush.msra.mxu0 0.0
    %138 = vmatpush.msra.mxu0 %v92
    %139 = vmatpush.msra.mxu0 %v91
    %140 = vmatmul.f32.gmra.mxu0 %v122
    %v141 = vpop.f32.mrf.mxu0
    %v142 = vadd.f32 0.0, %v141
    %143 = vdwg.mxu0
    %v145 = vsel %vm97, %v83, 0
    %147 = vmatpush.msra.mxu0 0.0
    %148 = vmatpush.msra.mxu0 0.0
    %149 = vmatpush.msra.mxu0 0.0
    %150 = vmatpush.msra.mxu0 0.0
    %151 = vmatpush.msra.mxu0 0.0
    %152 = vmatpush.msra.mxu0 0.0
    %153 = vmatpush.msra.mxu0 0.0
    %154 = vmatpush.msra.mxu0 0.0
    %155 = vmatpush.msra.mxu0 0.0
    %156 = vmatpush.msra.mxu0 0.0
    %157 = vmatpush.msra.mxu0 0.0
    %158 = vmatpush.msra.mxu0 0.0
    %159 = vmatpush.msra.mxu0 0.0
    %160 = vmatpush.msra.mxu0 0.0
    %161 = vmatpush.msra.mxu0 %v94
    %162 = vmatpush.msra.mxu0 %v93
    %163 = vmatmul.f32.gmra.mxu0 %v145
    %v164 = vpop.f32.mrf.mxu0
    %v165 = vadd.f32 0.0, %v164
    %166 = vdwg.mxu0
    %v168 = vsel %vm97, %v84, 0
    %170 = vmatpush.msra.mxu0 0.0
    %171 = vmatpush.msra.mxu0 0.0
    %172 = vmatpush.msra.mxu0 0.0
    %173 = vmatpush.msra.mxu0 0.0
    %174 = vmatpush.msra.mxu0 0.0
    %175 = vmatpush.msra.mxu0 0.0
    %176 = vmatpush.msra.mxu0 0.0
    %177 = vmatpush.msra.mxu0 0.0
    %178 = vmatpush.msra.mxu0 0.0
    %179 = vmatpush.msra.mxu0 0.0
    %180 = vmatpush.msra.mxu0 0.0
    %181 = vmatpush.msra.mxu0 0.0
    %182 = vmatpush.msra.mxu0 0.0
    %183 = vmatpush.msra.mxu0 0.0
    %184 = vmatpush.msra.mxu0 %v96
    %185 = vmatpush.msra.mxu0 %v95
    %186 = vmatmul.f32.gmra.mxu0 %v168
    %v187 = vpop.f32.mrf.mxu0
    %v188 = vadd.f32 0.0, %v187
    %189 = vdwg.mxu0
    %v190 = vld [vmem:[#allocation8] sm:$0xff]
    %v191 = vld [vmem:[#allocation8 + $0x8] sm:$0xff]
    %v192 = vld [vmem:[#allocation8 + $0x10] sm:$0xff]
    %v193 = vld [vmem:[#allocation8 + $0x18] sm:$0xff]
    %v194 = vld [vmem:[#allocation8 + $0x20] sm:$0xff]
    %v195 = vld [vmem:[#allocation8 + $0x28] sm:$0xff]
    %v196 = vld [vmem:[#allocation8 + $0x30] sm:$0xff]
    %v197 = vld [vmem:[#allocation8 + $0x38] sm:$0xff]
    %v198 = vld [vmem:[#allocation8 + $0x40] sm:$0xff]
    %v199 = vld [vmem:[#allocation8 + $0x48] sm:$0xff]
    %v200 = vld [vmem:[#allocation8 + $0x50] sm:$0xff]
    %v201 = vld [vmem:[#allocation8 + $0x58] sm:$0xff]
    %v202 = vld [vmem:[#allocation8 + $0x60] sm:$0xff]
    %v203 = vld [vmem:[#allocation8 + $0x68] sm:$0xff]
    %v204 = vld [vmem:[#allocation8 + $0x70] sm:$0xff]
    %v205 = vld [vmem:[#allocation8 + $0x78] sm:$0xff]
    %vm206 = vcmask 261120
    %v208 = vsel %vm206, %v85, 0
    %210 = vmatpush.msra.mxu0 0.0
    %211 = vmatpush.msra.mxu0 0.0
    %212 = vmatpush.msra.mxu0 0.0
    %213 = vmatpush.msra.mxu0 0.0
    %214 = vmatpush.msra.mxu0 0.0
    %215 = vmatpush.msra.mxu0 0.0
    %216 = vmatpush.msra.mxu0 0.0
    %217 = vmatpush.msra.mxu0 0.0
    %218 = vmatpush.msra.mxu0 0.0
    %219 = vmatpush.msra.mxu0 0.0
    %220 = vmatpush.msra.mxu0 0.0
    %221 = vmatpush.msra.mxu0 0.0
    %222 = vmatpush.msra.mxu0 %v193
    %223 = vmatpush.msra.mxu0 %v192
    %224 = vmatpush.msra.mxu0 %v191
    %225 = vmatpush.msra.mxu0 %v190
    %226 = vmatmul.f32.gmra.mxu0 %v208
    %v227 = vpop.f32.mrf.mxu0
    %v228 = vadd.f32 0.0, %v227
    %229 = vdwg.mxu0
    %v231 = vsel %vm206, %v86, 0
    %233 = vmatpush.msra.mxu0 0.0
    %234 = vmatpush.msra.mxu0 0.0
    %235 = vmatpush.msra.mxu0 0.0
    %236 = vmatpush.msra.mxu0 0.0
    %237 = vmatpush.msra.mxu0 0.0
    %238 = vmatpush.msra.mxu0 0.0
    %239 = vmatpush.msra.mxu0 0.0
    %240 = vmatpush.msra.mxu0 0.0
    %241 = vmatpush.msra.mxu0 0.0
    %242 = vmatpush.msra.mxu0 0.0
    %243 = vmatpush.msra.mxu0 0.0
    %244 = vmatpush.msra.mxu0 0.0
    %245 = vmatpush.msra.mxu0 %v197
    %246 = vmatpush.msra.mxu0 %v196
    %247 = vmatpush.msra.mxu0 %v195
    %248 = vmatpush.msra.mxu0 %v194
    %249 = vmatmul.f32.gmra.mxu0 %v231
    %v250 = vpop.f32.mrf.mxu0
    %v251 = vadd.f32 0.0, %v250
    %252 = vdwg.mxu0
    %v254 = vsel %vm206, %v87, 0
    %256 = vmatpush.msra.mxu0 0.0
    %257 = vmatpush.msra.mxu0 0.0
    %258 = vmatpush.msra.mxu0 0.0
    %259 = vmatpush.msra.mxu0 0.0
    %260 = vmatpush.msra.mxu0 0.0
    %261 = vmatpush.msra.mxu0 0.0
    %262 = vmatpush.msra.mxu0 0.0
    %263 = vmatpush.msra.mxu0 0.0
    %264 = vmatpush.msra.mxu0 0.0
    %265 = vmatpush.msra.mxu0 0.0
    %266 = vmatpush.msra.mxu0 0.0
    %267 = vmatpush.msra.mxu0 0.0
    %268 = vmatpush.msra.mxu0 %v201
    %269 = vmatpush.msra.mxu0 %v200
    %270 = vmatpush.msra.mxu0 %v199
    %271 = vmatpush.msra.mxu0 %v198
    %272 = vmatmul.f32.gmra.mxu0 %v254
    %v273 = vpop.f32.mrf.mxu0
    %v274 = vadd.f32 0.0, %v273
    %275 = vdwg.mxu0
    %v277 = vsel %vm206, %v88, 0
    %279 = vmatpush.msra.mxu0 0.0
    %280 = vmatpush.msra.mxu0 0.0
    %281 = vmatpush.msra.mxu0 0.0
    %282 = vmatpush.msra.mxu0 0.0
    %283 = vmatpush.msra.mxu0 0.0
    %284 = vmatpush.msra.mxu0 0.0
    %285 = vmatpush.msra.mxu0 0.0
    %286 = vmatpush.msra.mxu0 0.0
    %287 = vmatpush.msra.mxu0 0.0
    %288 = vmatpush.msra.mxu0 0.0
    %289 = vmatpush.msra.mxu0 0.0
    %290 = vmatpush.msra.mxu0 0.0
    %291 = vmatpush.msra.mxu0 %v205
    %292 = vmatpush.msra.mxu0 %v204
    %293 = vmatpush.msra.mxu0 %v203
    %294 = vmatpush.msra.mxu0 %v202
    %295 = vmatmul.f32.gmra.mxu0 %v277
    %v296 = vpop.f32.mrf.mxu0
    %v297 = vadd.f32 0.0, %v296
    %298 = vdwg.mxu0
    %v299 = vadd.f32 %v119, %v228
    %v300 = vadd.f32 %v142, %v251
    %v301 = vadd.f32 %v165, %v274
    %v302 = vadd.f32 %v188, %v297
    %v303 = vxor.u32 %v299, 2147483648
    %v304 = vxor.u32 %v300, 2147483648
    %v305 = vxor.u32 %v301, 2147483648
    %v306 = vxor.u32 %v302, 2147483648
    %v307 = vmul.f32 %v303, 1.442695
    %v308 = vpow.pop %v307
    %v309 = vmul.f32 %v304, 1.442695
    %v310 = vpow.pop %v309
    %v311 = vmul.f32 %v305, 1.442695
    %v312 = vpow.pop %v311
    %v313 = vmul.f32 %v306, 1.442695
    %v314 = vpow.pop %v313
    %v315 = vadd.f32 %v308, 1.0
    %v316 = vadd.f32 %v310, 1.0
    %v317 = vadd.f32 %v312, 1.0
    %v318 = vadd.f32 %v314, 1.0
    %v319 = vrcp.pop %v315
    %v320 = vmul.f32 %v315, %v319
    %v321 = vsub.f32 1.0, %v320
    %v322 = vmul.f32 %v319, %v321
    %v323 = vadd.f32 %v319, %v322
    %vm324 = vweird.f32 %v315
    %vm325 = vweird.f32 %v319
    %vm326 = vmor %vm324, %vm325
    %v327 = vsel %vm326, %v319, %v323
    %v328 = vand.u32 2147483647, %v315
    %vm329 = vcmp.eq.f32.partialorder %v328, 8.507059e+37
    %v330 = vand.u32 %v315, 2147483648
    %v331 = vor.u32 1.1754944e-38, %v330
    %v332 = vsel %vm329, %v331, %v327
    %v333 = vmul.f32 1.0, %v332
    %v334 = vrcp.pop %v316
    %v335 = vmul.f32 %v316, %v334
    %v336 = vsub.f32 1.0, %v335
    %v337 = vmul.f32 %v334, %v336
    %v338 = vadd.f32 %v334, %v337
    %vm339 = vweird.f32 %v316
    %vm340 = vweird.f32 %v334
    %vm341 = vmor %vm339, %vm340
    %v342 = vsel %vm341, %v334, %v338
    %v343 = vand.u32 2147483647, %v316
    %vm344 = vcmp.eq.f32.partialorder %v343, 8.507059e+37
    %v345 = vand.u32 %v316, 2147483648
    %v346 = vor.u32 1.1754944e-38, %v345
    %v347 = vsel %vm344, %v346, %v342
    %v348 = vmul.f32 1.0, %v347
    %v349 = vrcp.pop %v317
    %v350 = vmul.f32 %v317, %v349
    %v351 = vsub.f32 1.0, %v350
    %v352 = vmul.f32 %v349, %v351
    %v353 = vadd.f32 %v349, %v352
    %vm354 = vweird.f32 %v317
    %vm355 = vweird.f32 %v349
    %vm356 = vmor %vm354, %vm355
    %v357 = vsel %vm356, %v349, %v353
    %v358 = vand.u32 2147483647, %v317
    %vm359 = vcmp.eq.f32.partialorder %v358, 8.507059e+37
    %v360 = vand.u32 %v317, 2147483648
    %v361 = vor.u32 1.1754944e-38, %v360
    %v362 = vsel %vm359, %v361, %v357
    %v363 = vmul.f32 1.0, %v362
    %v364 = vrcp.pop %v318
    %v365 = vmul.f32 %v318, %v364
    %v366 = vsub.f32 1.0, %v365
    %v367 = vmul.f32 %v364, %v366
    %v368 = vadd.f32 %v364, %v367
    %vm369 = vweird.f32 %v318
    %vm370 = vweird.f32 %v364
    %vm371 = vmor %vm369, %vm370
    %v372 = vsel %vm371, %v364, %v368
    %v373 = vand.u32 2147483647, %v318
    %vm374 = vcmp.eq.f32.partialorder %v373, 8.507059e+37
    %v375 = vand.u32 %v318, 2147483648
    %v376 = vor.u32 1.1754944e-38, %v375
    %v377 = vsel %vm374, %v376, %v372
    %v378 = vmul.f32 1.0, %v377
    %383 = vrot.lane.b32.xlu0 %v228, 64
    %v384 = vpop.permute.xlu0 %383
    %385 = vrot.lane.b32.xlu0 %v251, 64
    %v386 = vpop.permute.xlu0 %385
    %387 = vrot.lane.b32.xlu0 %v274, 64
    %v388 = vpop.permute.xlu0 %387
    %389 = vrot.lane.b32.xlu0 %v297, 64
    %v390 = vpop.permute.xlu0 %389
    %v395 = vmul.f32 %v333, %v384
    %v396 = vmul.f32 %v348, %v386
    %v397 = vmul.f32 %v363, %v388
    %v398 = vmul.f32 %v378, %v390
    %403 = vrot.lane.b32.xlu0 %v395, 64
    %v404 = vpop.permute.xlu0 %403
    %405 = vrot.lane.b32.xlu0 %v396, 64
    %v406 = vpop.permute.xlu0 %405
    %407 = vrot.lane.b32.xlu0 %v397, 64
    %v408 = vpop.permute.xlu0 %407
    %409 = vrot.lane.b32.xlu0 %v398, 64
    %v410 = vpop.permute.xlu0 %409
    %v415 = vadd.f32 %v119, %v404
    %v416 = vadd.f32 %v142, %v406
    %v417 = vadd.f32 %v165, %v408
    %v418 = vadd.f32 %v188, %v410
    %v419 = vtanh.pop %v415
    %v420 = vtanh.pop %v416
    %v421 = vtanh.pop %v417
    %v422 = vtanh.pop %v418
    %427 = vrot.lane.b32.xlu0 %v419, 64
    %v428 = vpop.permute.xlu0 %427
    %429 = vrot.lane.b32.xlu0 %v420, 64
    %v430 = vpop.permute.xlu0 %429
    %431 = vrot.lane.b32.xlu0 %v421, 64
    %v432 = vpop.permute.xlu0 %431
    %433 = vrot.lane.b32.xlu0 %v422, 64
    %v434 = vpop.permute.xlu0 %433
    %v439 = vsub.f32 %v85, %v428
    %v440 = vsub.f32 %v86, %v430
    %v441 = vsub.f32 %v87, %v432
    %v442 = vsub.f32 %v88, %v434
    %447 = vrot.lane.b32.xlu0 %v439, 32
    %v448 = vpop.permute.xlu0 %447
    %449 = vrot.lane.b32.xlu0 %v440, 32
    %v450 = vpop.permute.xlu0 %449
    %451 = vrot.lane.b32.xlu0 %v441, 32
    %v452 = vpop.permute.xlu0 %451
    %453 = vrot.lane.b32.xlu0 %v442, 32
    %v454 = vpop.permute.xlu0 %453
    %v459 = vmul.f32 %v333, %v448
    %v460 = vmul.f32 %v348, %v450
    %v461 = vmul.f32 %v363, %v452
    %v462 = vmul.f32 %v378, %v454
    %467 = vrot.lane.b32.xlu0 %v459, 32
    %v468 = vpop.permute.xlu0 %467
    %469 = vrot.lane.b32.xlu0 %v460, 32
    %v470 = vpop.permute.xlu0 %469
    %471 = vrot.lane.b32.xlu0 %v461, 32
    %v472 = vpop.permute.xlu0 %471
    %473 = vrot.lane.b32.xlu0 %v462, 32
    %v474 = vpop.permute.xlu0 %473
    %v479 = vadd.f32 %v419, %v468
    %v480 = vadd.f32 %v420, %v470
    %v481 = vadd.f32 %v421, %v472
    %v482 = vadd.f32 %v422, %v474
    %487 = vrot.lane.b32.xlu0 %v479, 64
    %v488 = vpop.permute.xlu0 %487
    %489 = vrot.lane.b32.xlu0 %v480, 64
    %v490 = vpop.permute.xlu0 %489
    %491 = vrot.lane.b32.xlu0 %v481, 64
    %v492 = vpop.permute.xlu0 %491
    %493 = vrot.lane.b32.xlu0 %v482, 64
    %v494 = vpop.permute.xlu0 %493
    %vm499 = vcmask 254976
    %500 = vst.msk [vmem:[#allocation10] sm:$0x3] %vm499, %v488
    %501 = vst.msk [vmem:[#allocation10 + $0x2] sm:$0x3] %vm499, %v490
    %502 = vst.msk [vmem:[#allocation10 + $0x4] sm:$0x3] %vm499, %v492
    %503 = vst.msk [vmem:[#allocation10 + $0x6] sm:$0x3] %vm499, %v494
    // Predicated region
    $region34: #{tpu_custom_call.1} parent=1 // pred_check
      _
    $region35: #{tpu_custom_call.1} parent=1 // pred_check_branch
      %505 = sbr.rel (0) target = $region37
    $region36: #{tpu_custom_call.1} parent=1 // pred_region
      %507 = vsyncadd [#allocation4], 0
      %s508 = sshll.u32 [#allocation10], 4
      %s509 = int_to_ptr.vmem [resolvable:$true] %s508
      %s510 = sshll.u32 %s4, 4
      %s511 = int_to_ptr.hbm [resolvable:$true] %s510
      %516 = dma.vmem_to_hbm [thread:$0]  %s509, 128, %s511, [#allocation4], 32, 32, 2
    $region37: #{tpu_custom_call.1} parent=1 // pred_fallthru
      _
    // Predicated region
    $region38: #{tpu_custom_call.1} parent=1 // pred_check
      _
    $region39: #{tpu_custom_call.1} parent=1 // pred_check_branch
      %518 = sbr.rel (0) target = $region41
    $region40: #{tpu_custom_call.1} parent=1 // pred_region
      %520 = dma.done [#allocation4], 128
    $region41: #{tpu_custom_call.1} parent=1 // pred_fallthru
      _
    %521 = vsyncpa [#allocation3], 1
    %522 = vsyncpa [#allocation6], 1
    %523 = vsyncpa [#allocation9], 1
    %524 = vsyncpa [#allocation4], 1

</llo_original>
